<compile_context>
chip_gen: v5e
topology: v5e:2x2
jax: 0.10.0
libtpu: 0.0.40
codegen_flags: <defaults>
</compile_context>

<pallas_src>
import functools

import jax
import jax.numpy as jnp
from jax.experimental import pallas as pl
from jax.experimental.pallas import tpu as pltpu

_LANES = 1024      # lane-dense last dim (multiple of 128)
_ROW_TILE = 512    # rows per block -> 512*1024 elems per block


def _binary_tanh_kernel(x_ref, o_ref, *, scale: float):
    x = x_ref[...]
    if scale == 0.0:
        # 2 * hard_sigmoid(x) - 1 == clip(x, -1, 1)  (round term vanishes)
        o_ref[...] = jnp.clip(x, -1.0, 1.0).astype(o_ref.dtype)
        return
    h = jnp.clip((x + 1.0) * 0.5, 0.0, 1.0)
    r = jnp.round(h)  # round-half-to-even, same as torch.round
    if scale < 1.0:   # static python branch — matches SoftRoundFunction.forward
        y = (2.0 * scale) * r + (2.0 * (1.0 - scale)) * h - 1.0
    else:
        y = 2.0 * r - 1.0
    o_ref[...] = y.astype(o_ref.dtype)


@functools.partial(jax.jit, static_argnames=("scale",))
def _binary_activation_impl(x, *, scale: float):
    orig_shape = x.shape
    total = x.size

    # Lane-dense 2-D view: (rows, _LANES), rows padded to a whole number of blocks.
    rows = pl.cdiv(total, _LANES)
    if rows < _ROW_TILE:
        block_rows = rows                 # single row-block == full first dim (allowed)
        rows_padded = rows
    else:
        block_rows = _ROW_TILE
        rows_padded = pl.cdiv(rows, _ROW_TILE) * _ROW_TILE
    padded_total = rows_padded * _LANES

    flat = x.reshape(-1)
    if padded_total != total:
        flat = jnp.pad(flat, (0, padded_total - total))
    x2 = flat.reshape(rows_padded, _LANES)

    block = (block_rows, _LANES)
    grid = (rows_padded // block_rows,)

    # double-buffered input + output blocks, plus margin
    block_bytes = block_rows * _LANES * x.dtype.itemsize
    vmem_limit = max(4 * block_bytes + (1 << 20), 16 * 1024 * 1024)

    out2 = pl.pallas_call(
        functools.partial(_binary_tanh_kernel, scale=scale),
        out_shape=jax.ShapeDtypeStruct(x2.shape, x.dtype),
        grid=grid,
        in_specs=[pl.BlockSpec(block, lambda i: (i, 0))],
        out_specs=pl.BlockSpec(block, lambda i: (i, 0)),
        compiler_params=pltpu.CompilerParams(
            dimension_semantics=("parallel",),
            vmem_limit_bytes=vmem_limit,
        ),
    )(x2)

    out = out2.reshape(-1)
    if padded_total != total:
        out = out[:total]
    return out.reshape(orig_shape)


def binary_activation(x, t: float = 0.0, soft: bool = True,
                      stochastic: bool = False):
    """Pallas equivalent of BinaryActivation(t, soft, stochastic).forward(x)."""
    if stochastic:
        # TODO(synk): stochastic SoftBernoulli path (per-element bernoulli sampling) not implemented.
        raise NotImplementedError("stochastic=True path not implemented")
    scale = float(t) if soft else 1.0
    return _binary_activation_impl(x, scale=scale)


def _reference(x, scale):
    h = jnp.clip((x + 1.0) * 0.5, 0.0, 1.0)
    r = jnp.round(h)
    sr = scale * r + (1.0 - scale) * h if scale < 1.0 else r
    return 2.0 * sr - 1.0


if __name__ == "__main__":
    key = jax.random.PRNGKey(0)
    x = jax.random.normal(key, (2, 4, 16, 16), dtype=jnp.float32) * 2.0

    # Default module config: BinaryActivation(t=0.0, soft=True, stochastic=False)
    y = binary_activation(x, t=0.0, soft=True, stochastic=False)
    jax.block_until_ready(y)
    assert jnp.allclose(y, _reference(x, 0.0), atol=1e-6), "mismatch t=0.0"

    # Soft scale t=0.5
    y2 = binary_activation(x, t=0.5, soft=True)
    jax.block_until_ready(y2)
    assert jnp.allclose(y2, _reference(x, 0.5), atol=1e-6), "mismatch t=0.5"

    # Hard binarization path (soft=False -> scale=1)
    y3 = binary_activation(x, soft=False)
    jax.block_until_ready(y3)
    assert jnp.allclose(y3, _reference(x, 1.0), atol=1e-6), "mismatch soft=False"

    print("KERNEL_OK")
</pallas_src>

<mosaic_0001>
module attributes {stable_mosaic.version = 11 : i64} {
  func.func @_binary_tanh_kernel(%arg0: i32, %arg1: memref<2x1024xf32, #tpu.memory_space<vmem>>, %arg2: memref<2x1024xf32, #tpu.memory_space<vmem>>) attributes {dimension_semantics = [#tpu.dimension_semantics<parallel>], iteration_bounds = array<i64: 1>, scalar_prefetch = 0 : i64, scratch_operands = 0 : i64, tpu.core_type = #tpu.core_type<tc>, window_params = [{transform_indices = @transform_0, window_bounds = array<i64: 2, 1024>}, {transform_indices = @transform_1, window_bounds = array<i64: 2, 1024>}]} {
    %c0 = arith.constant 0 : index
    %c0_0 = arith.constant 0 : index
    %0 = vector.load %arg1[%c0, %c0_0] : memref<2x1024xf32, #tpu.memory_space<vmem>>, vector<2x1024xf32>
    %cst = arith.constant -1.000000e+00 : f32
    %cst_1 = arith.constant 1.000000e+00 : f32
    %1 = vector.broadcast %cst : f32 to vector<2x1024xf32>
    %2 = arith.maximumf %1, %0 : vector<2x1024xf32>
    %3 = vector.broadcast %cst_1 : f32 to vector<2x1024xf32>
    %4 = arith.minimumf %3, %2 : vector<2x1024xf32>
    %c0_2 = arith.constant 0 : index
    %c0_3 = arith.constant 0 : index
    %5 = vector.load %arg2[%c0_2, %c0_3] : memref<2x1024xf32, #tpu.memory_space<vmem>>, vector<2x1024xf32>
    tpu.vector_store %arg2[%c0_2, %c0_3], %4 {strides = array<i32>} : memref<2x1024xf32, #tpu.memory_space<vmem>>, vector<2x1024xf32>,
    return
  }
  func.func @transform_0(%arg0: i32) -> (i32, i32) {
    %c0_i32 = arith.constant 0 : i32
    %c0_i32_0 = arith.constant 0 : i32
    return %arg0, %c0_i32 : i32, i32
  }
  func.func @transform_1(%arg0: i32) -> (i32, i32) {
    %c0_i32 = arith.constant 0 : i32
    %c0_i32_0 = arith.constant 0 : i32
    return %arg0, %c0_i32 : i32, i32
  }
}

</mosaic_0001>

<llo_original>
// kernel: _binary_activation_impl.1
$region0: #{_binary_activation_impl.1}
  #allocation0 [shape = 'u32[]', space=smem, size = 0x4, offset = 0x4, fixed_abs, tag = 'smem constant byte address 0x4 - core index']
  #allocation1 [shape = 'u32[72,128]{1,0:T(1,128)}', space=vmem, size = 0x9000, scoped, tag = 'internal scratch']
  %s0 = inlined_call_operand.vmem [shape: f32[2,1024], index: 0, kind: input, shape index: {}]
  %s1 = inlined_call_operand.vmem [shape: f32[2,1024], index: 1, kind: output, shape index: {}]
  %s2 = sld [smem:[#allocation0]]
  $region14: #{_binary_activation_impl.1} parent=0
    _
  %s4 = ssub.s32 1, %s2
  %s5 = scalar_select 0, %s4, %s2
  // Predicated region
  $region2: #{_binary_activation_impl.1} parent=0 // pred_check
    _
  $region3: #{_binary_activation_impl.1} parent=0 // pred_check_branch
    %7 = sbr.rel (0) target = $region5
  $region4: #{_binary_activation_impl.1} parent=0 // pred_region
    _
  $region5: #{_binary_activation_impl.1} parent=0 // pred_fallthru
    _
  %v8 = vld [vmem:[%s0] sm:$0xff]
  %v9 = vld [vmem:[%s0 + $0x8] sm:$0xff]
  %v10 = vmax.f32 %v8, -1.0
  %v11 = vmax.f32 %v9, -1.0
  %v12 = vmin.f32 %v10, 1.0
  %v13 = vmin.f32 %v11, 1.0
  %14 = vst [vmem:[%s1] sm:$0xff] %v12
  %15 = vst [vmem:[%s1 + $0x8] sm:$0xff] %v13
  // Predicated region
  $region6: #{_binary_activation_impl.1} parent=0 // pred_check
    _
  $region7: #{_binary_activation_impl.1} parent=0 // pred_check_branch
    %17 = sbr.rel (0) target = $region9
  $region8: #{_binary_activation_impl.1} parent=0 // pred_region
    _
  $region9: #{_binary_activation_impl.1} parent=0 // pred_fallthru
    _
  // Predicated region
  $region10: #{_binary_activation_impl.1} parent=0 // pred_check
    _
  $region11: #{_binary_activation_impl.1} parent=0 // pred_check_branch
    %19 = sbr.rel (0) target = $region13
  $region12: #{_binary_activation_impl.1} parent=0 // pred_region
    _
  $region13: #{_binary_activation_impl.1} parent=0 // pred_fallthru
    _

</llo_original>
